<compile_context>
chip_gen: v7x
topology: tpu7x:2x2x1
jax: 0.10.0
libtpu: 0.0.40
codegen_flags: <defaults>
</compile_context>

<pallas_src>
import functools

import jax
import jax.numpy as jnp
from jax.experimental import pallas as pl
from jax.experimental.pallas import tpu as pltpu


def _round_up(x, m):
    return ((x + m - 1) // m) * m


# ----------------------------- Pallas kernel --------------------------------
def _marnd_kernel(
    x_ref, h_ref,
    wx_ref, bx_ref,                                    # fused x-LHS matmul (q_fc1|rnd_p1|rnd_t1|ngu)
    wihr_ref, whhr_ref, br_ref,                        # GRU r gate
    wihz_ref, whhz_ref, bz_ref,                        # GRU z gate
    wihn_ref, whhn_ref, bin_ref, bhn_ref,              # GRU n gate (b_hn stays inside r*(...))
    w2_ref, b2_ref,                                    # q_fc2
    wd_ref, bd_ref,                                    # fused RND second layer: [[Wp2],[-Wt2]], bp2-bt2
    out_ref,                                           # packed [tile_m, slab_w] output slab
    *, H, rnd_hidden, ngu_dim, n_actions, inv_rnd_out, slab_w,
):
    f32 = jnp.float32
    x = x_ref[...]
    h = h_ref[...]
    tm = x.shape[0]

    # --- one MXU pass for everything that consumes x -------------------------
    fused = jnp.dot(x, wx_ref[...], preferred_element_type=f32) + bx_ref[...]
    fused = jnp.maximum(fused, 0.0)
    y1 = fused[:, 0:H]                                     # relu(q_fc1(x))
    pt = fused[:, H:H + 2 * rnd_hidden]                    # [relu(rnd_pred_l1) | relu(rnd_tgt_l1)]
    ngu = fused[:, H + 2 * rnd_hidden:H + 2 * rnd_hidden + ngu_dim]  # relu(ngu_embed(x))

    # --- GRUCell, per-gate matmuls (PyTorch gate order r, z, n) --------------
    r = jax.nn.sigmoid(
        jnp.dot(y1, wihr_ref[...], preferred_element_type=f32)
        + jnp.dot(h, whhr_ref[...], preferred_element_type=f32)
        + br_ref[...])
    z = jax.nn.sigmoid(
        jnp.dot(y1, wihz_ref[...], preferred_element_type=f32)
        + jnp.dot(h, whhz_ref[...], preferred_element_type=f32)
        + bz_ref[...])
    i_n = jnp.dot(y1, wihn_ref[...], preferred_element_type=f32) + bin_ref[...]
    h_n = jnp.dot(h, whhn_ref[...], preferred_element_type=f32) + bhn_ref[...]
    n = jnp.tanh(i_n + r * h_n)
    h_new = (1.0 - z) * n + z * h

    # --- q_fc2 ----------------------------------------------------------------
    q = jnp.dot(h_new, w2_ref[...], preferred_element_type=f32) + b2_ref[...]

    # --- RND: predictor - target in one matmul, then per-row mean sq error ----
    diff = jnp.dot(pt, wd_ref[...], preferred_element_type=f32) + bd_ref[...]
    err = jnp.sum(diff * diff, axis=-1, keepdims=True) * inv_rnd_out

    # --- pack all outputs into one lane-dense slab -----------------------------
    used = H + ngu_dim + n_actions + 1
    pieces = [h_new, ngu, q, err]
    if slab_w > used:
        pieces.append(jnp.zeros((tm, slab_w - used), f32))
    out_ref[...] = jnp.concatenate(pieces, axis=-1)


# --------------------------- Parameter fusion ---------------------------------
def fuse_params(params):
    """Repack per-layer params into the kernel's fused layout."""
    H = params["w1"].shape[1]
    wih, whh = params["wih"], params["whh"]
    bih, bhh = params["bih"], params["bhh"]
    return {
        # x-LHS fusion: [w1 | wp1 | wt1 | wng]  (padded to 128 lanes in the wrapper)
        "wx": jnp.concatenate([params["w1"], params["wp1"], params["wt1"], params["wng"]], axis=1),
        "bx": jnp.concatenate([params["b1"], params["bp1"], params["bt1"], params["bng"]], axis=1),
        # per-gate GRU weights (lane-aligned outputs)
        "wihr": wih[:, 0:H], "wihz": wih[:, H:2 * H], "wihn": wih[:, 2 * H:3 * H],
        "whhr": whh[:, 0:H], "whhz": whh[:, H:2 * H], "whhn": whh[:, 2 * H:3 * H],
        "br": bih[:, 0:H] + bhh[:, 0:H],
        "bz": bih[:, H:2 * H] + bhh[:, H:2 * H],
        "bin": bih[:, 2 * H:3 * H],
        "bhn": bhh[:, 2 * H:3 * H],
        "w2": params["w2"], "b2": params["b2"],
        # RND second-layer difference matmul
        "wd": jnp.concatenate([params["wp2"], -params["wt2"]], axis=0),
        "bd": params["bp2"] - params["bt2"],
    }


# ------------------------------ Wrapper --------------------------------------
def marnd_forward(x, hidden, fp, *, n_agents, tile_m=512):
    """
    x:      [batch * n_agents, input_dim]       float32
    hidden: [batch, n_agents, rnn_hidden_dim]   float32
    fp:     output of fuse_params(params)
    Returns (local_q, h_out, rnd_loss, rnd_reward, ngu_reward, ngu_emb).
    """
    rows, input_dim = x.shape
    batch = hidden.shape[0]
    H = hidden.shape[-1]
    n_actions = fp["w2"].shape[1]
    rnd_hidden = fp["wd"].shape[0] // 2
    rnd_out = fp["wd"].shape[1]
    ngu_dim = fp["wx"].shape[1] - H - 2 * rnd_hidden

    h_in = hidden.reshape(-1, H)

    # Pad the fused x-weight to a 128-lane-dense width (trivial, traced once per call).
    c1 = H + 2 * rnd_hidden + ngu_dim
    c1p = _round_up(c1, 128)
    wx = jnp.pad(fp["wx"], ((0, 0), (0, c1p - c1)))
    bx = jnp.pad(fp["bx"], ((0, 0), (0, c1p - c1)))

    slab_w = _round_up(H + ngu_dim + n_actions + 1, 128)

    # Row tiling: big tiles (step overhead ~0.35us) but never larger than rows.
    tm = rows if rows <= tile_m else tile_m
    grid = (pl.cdiv(rows, tm),)

    weights = [
        wx, bx,
        fp["wihr"], fp["whhr"], fp["br"],
        fp["wihz"], fp["whhz"], fp["bz"],
        fp["wihn"], fp["whhn"], fp["bin"], fp["bhn"],
        fp["w2"], fp["b2"],
        fp["wd"], fp["bd"],
    ]

    def row_spec(width):
        return pl.BlockSpec((tm, width), lambda i: (i, 0))

    def resident_spec(arr):
        nd = arr.ndim
        return pl.BlockSpec(arr.shape, lambda i, _nd=nd: (0,) * _nd)

    in_specs = [row_spec(input_dim), row_spec(H)] + [resident_spec(w) for w in weights]
    out_spec = pl.BlockSpec((tm, slab_w), lambda i: (i, 0))

    kernel = functools.partial(
        _marnd_kernel,
        H=H, rnd_hidden=rnd_hidden, ngu_dim=ngu_dim, n_actions=n_actions,
        inv_rnd_out=1.0 / float(rnd_out), slab_w=slab_w,
    )

    flops = 2 * rows * (input_dim * c1p + 6 * H * H + H * n_actions
                        + 2 * rnd_hidden * rnd_out) + 12 * rows * H
    transcendentals = 3 * rows * H
    bytes_accessed = 4 * (rows * input_dim + rows * H + rows * slab_w
                          + sum(int(w.size) for w in weights))

    slab = pl.pallas_call(
        kernel,
        out_shape=jax.ShapeDtypeStruct((rows, slab_w), jnp.float32),
        grid_spec=pltpu.PrefetchScalarGridSpec(
            num_scalar_prefetch=0,
            grid=grid,
            in_specs=in_specs,
            out_specs=out_spec,
        ),
        compiler_params=pltpu.CompilerParams(
            dimension_semantics=("parallel",),
            vmem_limit_bytes=32 * 1024 * 1024,
        ),
        cost_estimate=pl.CostEstimate(
            flops=flops, transcendentals=transcendentals, bytes_accessed=bytes_accessed),
    )(x, h_in, *weights)

    # Unpack the lane-dense slab.
    h_out = slab[:, 0:H]
    ngu_emb = slab[:, H:H + ngu_dim]
    q = slab[:, H + ngu_dim:H + ngu_dim + n_actions]
    rnd_row = slab[:, H + ngu_dim + n_actions]

    local_q = q[None]                                  # unsqueeze(0) -> [1, rows, n_actions]
    rnd_reward = rnd_row.reshape(batch, n_agents)      # [batch, n_agents]
    rnd_loss = jnp.mean(rnd_reward, axis=1)            # [batch]

    # TODO(synk): RND / NGUEmbeddingModel / compute_intrinsic_reward class defs are not
    # in the reference source; the episodic-memory kNN intrinsic reward is not
    # reproducible, so ngu_reward is a zeros array (consistent dtype/shape); the NGU
    # embedding itself IS computed in-kernel and returned as ngu_emb.
    ngu_reward = jnp.zeros((n_agents,), dtype=jnp.float32)

    return local_q, h_out, rnd_loss, rnd_reward, ngu_reward, ngu_emb


# --------------------------- Parameter construction ---------------------------
def init_params(key, input_dim, rnn_hidden, n_actions, rnd_hidden, rnd_out, ngu_dim):
    """PyTorch-Linear-style init (uniform +-1/sqrt(fan_in)); weights stored [in, out]."""
    def linear(k, fan_in, fan_out):
        k1, k2 = jax.random.split(k)
        bound = 1.0 / jnp.sqrt(jnp.float32(fan_in))
        w = jax.random.uniform(k1, (fan_in, fan_out), jnp.float32, -bound, bound)
        b = jax.random.uniform(k2, (1, fan_out), jnp.float32, -bound, bound)
        return w, b

    keys = jax.random.split(key, 9)
    p = {}
    p["w1"], p["b1"] = linear(keys[0], input_dim, rnn_hidden)
    p["wih"], p["bih"] = linear(keys[1], rnn_hidden, 3 * rnn_hidden)
    p["whh"], p["bhh"] = linear(keys[2], rnn_hidden, 3 * rnn_hidden)
    p["w2"], p["b2"] = linear(keys[3], rnn_hidden, n_actions)
    p["wp1"], p["bp1"] = linear(keys[4], input_dim, rnd_hidden)
    p["wp2"], p["bp2"] = linear(keys[5], rnd_hidden, rnd_out)
    p["wt1"], p["bt1"] = linear(keys[6], input_dim, rnd_hidden)
    p["wt2"], p["bt2"] = linear(keys[7], rnd_hidden, rnd_out)
    p["wng"], p["bng"] = linear(keys[8], input_dim, ngu_dim)
    return p


# ------------------------------- Reference ------------------------------------
def _reference(x, hidden, params, n_agents):
    """Pure-JAX reference of the same math (un-fused parameter layout)."""
    H = hidden.shape[-1]
    h = hidden.reshape(-1, H)
    y1 = jax.nn.relu(x @ params["w1"] + params["b1"])
    gi = y1 @ params["wih"] + params["bih"]
    gh = h @ params["whh"] + params["bhh"]
    r = jax.nn.sigmoid(gi[:, :H] + gh[:, :H])
    z = jax.nn.sigmoid(gi[:, H:2 * H] + gh[:, H:2 * H])
    n = jnp.tanh(gi[:, 2 * H:] + r * gh[:, 2 * H:])
    h_new = (1 - z) * n + z * h
    q = (h_new @ params["w2"] + params["b2"])[None]
    pred = jax.nn.relu(x @ params["wp1"] + params["bp1"]) @ params["wp2"] + params["bp2"]
    tgt = jax.nn.relu(x @ params["wt1"] + params["bt1"]) @ params["wt2"] + params["bt2"]
    err = jnp.mean((pred - tgt) ** 2, axis=-1)
    rnd_reward = err.reshape(hidden.shape[0], n_agents)
    rnd_loss = rnd_reward.mean(axis=1)
    ngu = jax.nn.relu(x @ params["wng"] + params["bng"])
    return q, h_new, rnd_loss, rnd_reward, ngu


# --------------------------------- Main ----------------------------------------
if __name__ == "__main__":
    batch = 2
    n_agents = 4
    input_dim = 32
    rnn_hidden_dim = 32
    n_actions = 8
    rnd_hidden_dim = 32
    rnd_output_dim = 16
    ngu_embedding_dim = 16

    key = jax.random.PRNGKey(0)
    k_x, k_h, k_p = jax.random.split(key, 3)

    x = jax.random.normal(k_x, (batch * n_agents, input_dim), jnp.float32)
    hidden = jax.random.normal(k_h, (batch, n_agents, rnn_hidden_dim), jnp.float32)
    params = init_params(
        k_p, input_dim, rnn_hidden_dim, n_actions,
        rnd_hidden_dim, rnd_output_dim, ngu_embedding_dim,
    )
    fused = jax.tree_util.tree_map(lambda a: a, fuse_params(params))  # fuse once, outside jit

    fwd = jax.jit(functools.partial(marnd_forward, n_agents=n_agents))
    local_q, h_out, rnd_loss, rnd_reward, ngu_reward, ngu_emb = fwd(x, hidden, fused)
    jax.block_until_ready((local_q, h_out, rnd_loss, rnd_reward, ngu_reward, ngu_emb))

    # Sanity-check against the pure-JAX reference.
    rq, rh, rl, rr, rngu = _reference(x, hidden, params, n_agents)
    assert local_q.shape == (1, batch * n_agents, n_actions)
    assert h_out.shape == (batch * n_agents, rnn_hidden_dim)
    assert rnd_loss.shape == (batch,)
    assert rnd_reward.shape == (batch, n_agents)
    assert ngu_reward.shape == (n_agents,)
    assert ngu_emb.shape == (batch * n_agents, ngu_embedding_dim)
    assert jnp.allclose(local_q, rq, atol=1e-4, rtol=1e-4)
    assert jnp.allclose(h_out, rh, atol=1e-4, rtol=1e-4)
    assert jnp.allclose(rnd_loss, rl, atol=1e-4, rtol=1e-4)
    assert jnp.allclose(rnd_reward, rr, atol=1e-4, rtol=1e-4)
    assert jnp.allclose(ngu_emb, rngu, atol=1e-4, rtol=1e-4)

    print("KERNEL_OK")
</pallas_src>

<mosaic_0001>
module attributes {stable_mosaic.version = 11 : i64} {
  func.func @_marnd_kernel(%arg0: i32, %arg1: memref<8x32xf32, #tpu.memory_space<vmem>>, %arg2: memref<8x32xf32, #tpu.memory_space<vmem>>, %arg3: memref<32x128xf32, #tpu.memory_space<vmem>>, %arg4: memref<1x128xf32, #tpu.memory_space<vmem>>, %arg5: memref<32x32xf32, #tpu.memory_space<vmem>>, %arg6: memref<32x32xf32, #tpu.memory_space<vmem>>, %arg7: memref<1x32xf32, #tpu.memory_space<vmem>>, %arg8: memref<32x32xf32, #tpu.memory_space<vmem>>, %arg9: memref<32x32xf32, #tpu.memory_space<vmem>>, %arg10: memref<1x32xf32, #tpu.memory_space<vmem>>, %arg11: memref<32x32xf32, #tpu.memory_space<vmem>>, %arg12: memref<32x32xf32, #tpu.memory_space<vmem>>, %arg13: memref<1x32xf32, #tpu.memory_space<vmem>>, %arg14: memref<1x32xf32, #tpu.memory_space<vmem>>, %arg15: memref<32x8xf32, #tpu.memory_space<vmem>>, %arg16: memref<1x8xf32, #tpu.memory_space<vmem>>, %arg17: memref<64x16xf32, #tpu.memory_space<vmem>>, %arg18: memref<1x16xf32, #tpu.memory_space<vmem>>, %arg19: memref<8x128xf32, #tpu.memory_space<vmem>>) attributes {dimension_semantics = [#tpu.dimension_semantics<parallel>], iteration_bounds = array<i64: 1>, scalar_prefetch = 0 : i64, scratch_operands = 0 : i64, tpu.core_type = #tpu.core_type<tc>, window_params = [{transform_indices = @transform_0, window_bounds = array<i64: 8, 32>}, {transform_indices = @transform_1, window_bounds = array<i64: 8, 32>}, {pipeline_mode = #tpu.pipeline_mode<synchronous>, transform_indices = @transform_2, window_bounds = array<i64: 32, 128>}, {pipeline_mode = #tpu.pipeline_mode<synchronous>, transform_indices = @transform_3, window_bounds = array<i64: 1, 128>}, {pipeline_mode = #tpu.pipeline_mode<synchronous>, transform_indices = @transform_4, window_bounds = array<i64: 32, 32>}, {pipeline_mode = #tpu.pipeline_mode<synchronous>, transform_indices = @transform_5, window_bounds = array<i64: 32, 32>}, {pipeline_mode = #tpu.pipeline_mode<synchronous>, transform_indices = @transform_6, window_bounds = array<i64: 1, 32>}, {pipeline_mode = #tpu.pipeline_mode<synchronous>, transform_indices = @transform_7, window_bounds = array<i64: 32, 32>}, {pipeline_mode = #tpu.pipeline_mode<synchronous>, transform_indices = @transform_8, window_bounds = array<i64: 32, 32>}, {pipeline_mode = #tpu.pipeline_mode<synchronous>, transform_indices = @transform_9, window_bounds = array<i64: 1, 32>}, {pipeline_mode = #tpu.pipeline_mode<synchronous>, transform_indices = @transform_10, window_bounds = array<i64: 32, 32>}, {pipeline_mode = #tpu.pipeline_mode<synchronous>, transform_indices = @transform_11, window_bounds = array<i64: 32, 32>}, {pipeline_mode = #tpu.pipeline_mode<synchronous>, transform_indices = @transform_12, window_bounds = array<i64: 1, 32>}, {pipeline_mode = #tpu.pipeline_mode<synchronous>, transform_indices = @transform_13, window_bounds = array<i64: 1, 32>}, {pipeline_mode = #tpu.pipeline_mode<synchronous>, transform_indices = @transform_14, window_bounds = array<i64: 32, 8>}, {pipeline_mode = #tpu.pipeline_mode<synchronous>, transform_indices = @transform_15, window_bounds = array<i64: 1, 8>}, {pipeline_mode = #tpu.pipeline_mode<synchronous>, transform_indices = @transform_16, window_bounds = array<i64: 64, 16>}, {pipeline_mode = #tpu.pipeline_mode<synchronous>, transform_indices = @transform_17, window_bounds = array<i64: 1, 16>}, {transform_indices = @transform_18, window_bounds = array<i64: 8, 128>}]} {
    %c0 = arith.constant 0 : index
    %c0_0 = arith.constant 0 : index
    %0 = vector.load %arg1[%c0, %c0_0] : memref<8x32xf32, #tpu.memory_space<vmem>>, vector<8x32xf32>
    %c0_1 = arith.constant 0 : index
    %c0_2 = arith.constant 0 : index
    %1 = vector.load %arg2[%c0_1, %c0_2] : memref<8x32xf32, #tpu.memory_space<vmem>>, vector<8x32xf32>
    %c0_3 = arith.constant 0 : index
    %c0_4 = arith.constant 0 : index
    %2 = vector.load %arg3[%c0_3, %c0_4] : memref<32x128xf32, #tpu.memory_space<vmem>>, vector<32x128xf32>
    %cst = arith.constant dense<0.000000e+00> : vector<8x128xf32>
    %3 = tpu.matmul %0, %2, %cst {dimension_numbers = #tpu.dot_dimension_numbers<[1], [0], [0], [1], [0, 0, 1, 1], [], []>} : vector<8x32xf32>, vector<32x128xf32>, vector<8x128xf32> -> vector<8x128xf32>
    %c0_5 = arith.constant 0 : index
    %c0_6 = arith.constant 0 : index
    %4 = vector.load %arg4[%c0_5, %c0_6] : memref<1x128xf32, #tpu.memory_space<vmem>>, vector<1x128xf32>
    %5 = vector.broadcast %4 : vector<1x128xf32> to vector<8x128xf32>
    %6 = arith.addf %3, %5 : vector<8x128xf32>
    %cst_7 = arith.constant 0.000000e+00 : f32
    %7 = vector.broadcast %cst_7 : f32 to vector<8x128xf32>
    %8 = arith.maximumf %6, %7 : vector<8x128xf32>
    %9 = vector.extract_strided_slice %8 {offsets = [0, 0], sizes = [8, 32], strides = [1, 1]} : vector<8x128xf32> to vector<8x32xf32>
    %10 = vector.extract_strided_slice %8 {offsets = [0, 32], sizes = [8, 64], strides = [1, 1]} : vector<8x128xf32> to vector<8x64xf32>
    %11 = vector.extract_strided_slice %8 {offsets = [0, 96], sizes = [8, 16], strides = [1, 1]} : vector<8x128xf32> to vector<8x16xf32>
    %c0_8 = arith.constant 0 : index
    %c0_9 = arith.constant 0 : index
    %12 = vector.load %arg5[%c0_8, %c0_9] : memref<32x32xf32, #tpu.memory_space<vmem>>, vector<32x32xf32>
    %cst_10 = arith.constant dense<0.000000e+00> : vector<8x32xf32>
    %13 = tpu.matmul %9, %12, %cst_10 {dimension_numbers = #tpu.dot_dimension_numbers<[1], [0], [0], [1], [0, 0, 1, 1], [], []>} : vector<8x32xf32>, vector<32x32xf32>, vector<8x32xf32> -> vector<8x32xf32>
    %c0_11 = arith.constant 0 : index
    %c0_12 = arith.constant 0 : index
    %14 = vector.load %arg6[%c0_11, %c0_12] : memref<32x32xf32, #tpu.memory_space<vmem>>, vector<32x32xf32>
    %cst_13 = arith.constant dense<0.000000e+00> : vector<8x32xf32>
    %15 = tpu.matmul %1, %14, %cst_13 {dimension_numbers = #tpu.dot_dimension_numbers<[1], [0], [0], [1], [0, 0, 1, 1], [], []>} : vector<8x32xf32>, vector<32x32xf32>, vector<8x32xf32> -> vector<8x32xf32>
    %16 = arith.addf %13, %15 : vector<8x32xf32>
    %c0_14 = arith.constant 0 : index
    %c0_15 = arith.constant 0 : index
    %17 = vector.load %arg7[%c0_14, %c0_15] : memref<1x32xf32, #tpu.memory_space<vmem>>, vector<1x32xf32>
    %18 = vector.broadcast %17 : vector<1x32xf32> to vector<8x32xf32>
    %19 = arith.addf %16, %18 : vector<8x32xf32>
    %20 = arith.negf %19 : vector<8x32xf32>
    %21 = math.exp %20 : vector<8x32xf32>
    %cst_16 = arith.constant 1.000000e+00 : f32
    %22 = vector.broadcast %cst_16 : f32 to vector<8x32xf32>
    %23 = arith.addf %22, %21 : vector<8x32xf32>
    %24 = arith.divf %22, %23 : vector<8x32xf32>
    %c0_17 = arith.constant 0 : index
    %c0_18 = arith.constant 0 : index
    %25 = vector.load %arg8[%c0_17, %c0_18] : memref<32x32xf32, #tpu.memory_space<vmem>>, vector<32x32xf32>
    %cst_19 = arith.constant dense<0.000000e+00> : vector<8x32xf32>
    %26 = tpu.matmul %9, %25, %cst_19 {dimension_numbers = #tpu.dot_dimension_numbers<[1], [0], [0], [1], [0, 0, 1, 1], [], []>} : vector<8x32xf32>, vector<32x32xf32>, vector<8x32xf32> -> vector<8x32xf32>
    %c0_20 = arith.constant 0 : index
    %c0_21 = arith.constant 0 : index
    %27 = vector.load %arg9[%c0_20, %c0_21] : memref<32x32xf32, #tpu.memory_space<vmem>>, vector<32x32xf32>
    %cst_22 = arith.constant dense<0.000000e+00> : vector<8x32xf32>
    %28 = tpu.matmul %1, %27, %cst_22 {dimension_numbers = #tpu.dot_dimension_numbers<[1], [0], [0], [1], [0, 0, 1, 1], [], []>} : vector<8x32xf32>, vector<32x32xf32>, vector<8x32xf32> -> vector<8x32xf32>
    %29 = arith.addf %26, %28 : vector<8x32xf32>
    %c0_23 = arith.constant 0 : index
    %c0_24 = arith.constant 0 : index
    %30 = vector.load %arg10[%c0_23, %c0_24] : memref<1x32xf32, #tpu.memory_space<vmem>>, vector<1x32xf32>
    %31 = vector.broadcast %30 : vector<1x32xf32> to vector<8x32xf32>
    %32 = arith.addf %29, %31 : vector<8x32xf32>
    %33 = arith.negf %32 : vector<8x32xf32>
    %34 = math.exp %33 : vector<8x32xf32>
    %cst_25 = arith.constant 1.000000e+00 : f32
    %35 = vector.broadcast %cst_25 : f32 to vector<8x32xf32>
    %36 = arith.addf %35, %34 : vector<8x32xf32>
    %37 = arith.divf %35, %36 : vector<8x32xf32>
    %c0_26 = arith.constant 0 : index
    %c0_27 = arith.constant 0 : index
    %38 = vector.load %arg11[%c0_26, %c0_27] : memref<32x32xf32, #tpu.memory_space<vmem>>, vector<32x32xf32>
    %cst_28 = arith.constant dense<0.000000e+00> : vector<8x32xf32>
    %39 = tpu.matmul %9, %38, %cst_28 {dimension_numbers = #tpu.dot_dimension_numbers<[1], [0], [0], [1], [0, 0, 1, 1], [], []>} : vector<8x32xf32>, vector<32x32xf32>, vector<8x32xf32> -> vector<8x32xf32>
    %c0_29 = arith.constant 0 : index
    %c0_30 = arith.constant 0 : index
    %40 = vector.load %arg13[%c0_29, %c0_30] : memref<1x32xf32, #tpu.memory_space<vmem>>, vector<1x32xf32>
    %41 = vector.broadcast %40 : vector<1x32xf32> to vector<8x32xf32>
    %42 = arith.addf %39, %41 : vector<8x32xf32>
    %c0_31 = arith.constant 0 : index
    %c0_32 = arith.constant 0 : index
    %43 = vector.load %arg12[%c0_31, %c0_32] : memref<32x32xf32, #tpu.memory_space<vmem>>, vector<32x32xf32>
    %cst_33 = arith.constant dense<0.000000e+00> : vector<8x32xf32>
    %44 = tpu.matmul %1, %43, %cst_33 {dimension_numbers = #tpu.dot_dimension_numbers<[1], [0], [0], [1], [0, 0, 1, 1], [], []>} : vector<8x32xf32>, vector<32x32xf32>, vector<8x32xf32> -> vector<8x32xf32>
    %c0_34 = arith.constant 0 : index
    %c0_35 = arith.constant 0 : index
    %45 = vector.load %arg14[%c0_34, %c0_35] : memref<1x32xf32, #tpu.memory_space<vmem>>, vector<1x32xf32>
    %46 = vector.broadcast %45 : vector<1x32xf32> to vector<8x32xf32>
    %47 = arith.addf %44, %46 : vector<8x32xf32>
    %48 = arith.mulf %24, %47 : vector<8x32xf32>
    %49 = arith.addf %42, %48 : vector<8x32xf32>
    %50 = math.tanh %49 : vector<8x32xf32>
    %cst_36 = arith.constant 1.000000e+00 : f32
    %51 = vector.broadcast %cst_36 : f32 to vector<8x32xf32>
    %52 = arith.subf %51, %37 : vector<8x32xf32>
    %53 = arith.mulf %52, %50 : vector<8x32xf32>
    %54 = arith.mulf %37, %1 : vector<8x32xf32>
    %55 = arith.addf %53, %54 : vector<8x32xf32>
    %c0_37 = arith.constant 0 : index
    %c0_38 = arith.constant 0 : index
    %56 = vector.load %arg15[%c0_37, %c0_38] : memref<32x8xf32, #tpu.memory_space<vmem>>, vector<32x8xf32>
    %cst_39 = arith.constant dense<0.000000e+00> : vector<8x8xf32>
    %57 = tpu.matmul %55, %56, %cst_39 {dimension_numbers = #tpu.dot_dimension_numbers<[1], [0], [0], [1], [0, 0, 1, 1], [], []>} : vector<8x32xf32>, vector<32x8xf32>, vector<8x8xf32> -> vector<8x8xf32>
    %c0_40 = arith.constant 0 : index
    %c0_41 = arith.constant 0 : index
    %58 = vector.load %arg16[%c0_40, %c0_41] : memref<1x8xf32, #tpu.memory_space<vmem>>, vector<1x8xf32>
    %59 = vector.broadcast %58 : vector<1x8xf32> to vector<8x8xf32>
    %60 = arith.addf %57, %59 : vector<8x8xf32>
    %c0_42 = arith.constant 0 : index
    %c0_43 = arith.constant 0 : index
    %61 = vector.load %arg17[%c0_42, %c0_43] : memref<64x16xf32, #tpu.memory_space<vmem>>, vector<64x16xf32>
    %cst_44 = arith.constant dense<0.000000e+00> : vector<8x16xf32>
    %62 = tpu.matmul %10, %61, %cst_44 {dimension_numbers = #tpu.dot_dimension_numbers<[1], [0], [0], [1], [0, 0, 1, 1], [], []>} : vector<8x64xf32>, vector<64x16xf32>, vector<8x16xf32> -> vector<8x16xf32>
    %c0_45 = arith.constant 0 : index
    %c0_46 = arith.constant 0 : index
    %63 = vector.load %arg18[%c0_45, %c0_46] : memref<1x16xf32, #tpu.memory_space<vmem>>, vector<1x16xf32>
    %64 = vector.broadcast %63 : vector<1x16xf32> to vector<8x16xf32>
    %65 = arith.addf %62, %64 : vector<8x16xf32>
    %66 = arith.mulf %65, %65 : vector<8x16xf32>
    %cst_47 = arith.constant dense<0.000000e+00> : vector<8xf32>
    %67 = vector.multi_reduction <add>, %66, %cst_47 [1] : vector<8x16xf32> to vector<8xf32>
    %68 = vector.shape_cast %67 : vector<8xf32> to vector<8x1xf32>
    %cst_48 = arith.constant 6.250000e-02 : f32
    %69 = vector.broadcast %cst_48 : f32 to vector<8x1xf32>
    %70 = arith.mulf %68, %69 : vector<8x1xf32>
    %cst_49 = arith.constant 0.000000e+00 : f32
    %71 = vector.broadcast %cst_49 : f32 to vector<8x71xf32>
    %72 = tpu.concatenate %55, %11, %60, %70, %71 in 1 : vector<8x32xf32>, vector<8x16xf32>, vector<8x8xf32>, vector<8x1xf32>, vector<8x71xf32> -> vector<8x128xf32>
    %c0_50 = arith.constant 0 : index
    %c0_51 = arith.constant 0 : index
    %73 = vector.load %arg19[%c0_50, %c0_51] : memref<8x128xf32, #tpu.memory_space<vmem>>, vector<8x128xf32>
    tpu.vector_store %arg19[%c0_50, %c0_51], %72 {strides = array<i32>} : memref<8x128xf32, #tpu.memory_space<vmem>>, vector<8x128xf32>,
    return
  }
  func.func @transform_0(%arg0: i32) -> (i32, i32) {
    %c0_i32 = arith.constant 0 : i32
    %c0_i32_0 = arith.constant 0 : i32
    return %arg0, %c0_i32 : i32, i32
  }
  func.func @transform_1(%arg0: i32) -> (i32, i32) {
    %c0_i32 = arith.constant 0 : i32
    %c0_i32_0 = arith.constant 0 : i32
    return %arg0, %c0_i32 : i32, i32
  }
  func.func @transform_2(%arg0: i32) -> (i32, i32) {
    %c0_i32 = arith.constant 0 : i32
    %c0_i32_0 = arith.constant 0 : i32
    %c0_i32_1 = arith.constant 0 : i32
    return %c0_i32, %c0_i32_0 : i32, i32
  }
  func.func @transform_3(%arg0: i32) -> (i32, i32) {
    %c0_i32 = arith.constant 0 : i32
    %c0_i32_0 = arith.constant 0 : i32
    %c0_i32_1 = arith.constant 0 : i32
    return %c0_i32, %c0_i32_0 : i32, i32
  }
  func.func @transform_4(%arg0: i32) -> (i32, i32) {
    %c0_i32 = arith.constant 0 : i32
    %c0_i32_0 = arith.constant 0 : i32
    %c0_i32_1 = arith.constant 0 : i32
    return %c0_i32, %c0_i32_0 : i32, i32
  }
  func.func @transform_5(%arg0: i32) -> (i32, i32) {
    %c0_i32 = arith.constant 0 : i32
    %c0_i32_0 = arith.constant 0 : i32
    %c0_i32_1 = arith.constant 0 : i32
    return %c0_i32, %c0_i32_0 : i32, i32
  }
  func.func @transform_6(%arg0: i32) -> (i32, i32) {
    %c0_i32 = arith.constant 0 : i32
    %c0_i32_0 = arith.constant 0 : i32
    %c0_i32_1 = arith.constant 0 : i32
    return %c0_i32, %c0_i32_0 : i32, i32
  }
  func.func @transform_7(%arg0: i32) -> (i32, i32) {
    %c0_i32 = arith.constant 0 : i32
    %c0_i32_0 = arith.constant 0 : i32
    %c0_i32_1 = arith.constant 0 : i32
    return %c0_i32, %c0_i32_0 : i32, i32
  }
  func.func @transform_8(%arg0: i32) -> (i32, i32) {
    %c0_i32 = arith.constant 0 : i32
    %c0_i32_0 = arith.constant 0 : i32
    %c0_i32_1 = arith.constant 0 : i32
    return %c0_i32, %c0_i32_0 : i32, i32
  }
  func.func @transform_9(%arg0: i32) -> (i32, i32) {
    %c0_i32 = arith.constant 0 : i32
    %c0_i32_0 = arith.constant 0 : i32
    %c0_i32_1 = arith.constant 0 : i32
    return %c0_i32, %c0_i32_0 : i32, i32
  }
  func.func @transform_10(%arg0: i32) -> (i32, i32) {
    %c0_i32 = arith.constant 0 : i32
    %c0_i32_0 = arith.constant 0 : i32
    %c0_i32_1 = arith.constant 0 : i32
    return %c0_i32, %c0_i32_0 : i32, i32
  }
  func.func @transform_11(%arg0: i32) -> (i32, i32) {
    %c0_i32 = arith.constant 0 : i32
    %c0_i32_0 = arith.constant 0 : i32
    %c0_i32_1 = arith.constant 0 : i32
    return %c0_i32, %c0_i32_0 : i32, i32
  }
  func.func @transform_12(%arg0: i32) -> (i32, i32) {
    %c0_i32 = arith.constant 0 : i32
    %c0_i32_0 = arith.constant 0 : i32
    %c0_i32_1 = arith.constant 0 : i32
    return %c0_i32, %c0_i32_0 : i32, i32
  }
  func.func @transform_13(%arg0: i32) -> (i32, i32) {
    %c0_i32 = arith.constant 0 : i32
    %c0_i32_0 = arith.constant 0 : i32
    %c0_i32_1 = arith.constant 0 : i32
    return %c0_i32, %c0_i32_0 : i32, i32
  }
  func.func @transform_14(%arg0: i32) -> (i32, i32) {
    %c0_i32 = arith.constant 0 : i32
    %c0_i32_0 = arith.constant 0 : i32
    %c0_i32_1 = arith.constant 0 : i32
    return %c0_i32, %c0_i32_0 : i32, i32
  }
  func.func @transform_15(%arg0: i32) -> (i32, i32) {
    %c0_i32 = arith.constant 0 : i32
    %c0_i32_0 = arith.constant 0 : i32
    %c0_i32_1 = arith.constant 0 : i32
    return %c0_i32, %c0_i32_0 : i32, i32
  }
  func.func @transform_16(%arg0: i32) -> (i32, i32) {
    %c0_i32 = arith.constant 0 : i32
    %c0_i32_0 = arith.constant 0 : i32
    %c0_i32_1 = arith.constant 0 : i32
    return %c0_i32, %c0_i32_0 : i32, i32
  }
  func.func @transform_17(%arg0: i32) -> (i32, i32) {
    %c0_i32 = arith.constant 0 : i32
    %c0_i32_0 = arith.constant 0 : i32
    %c0_i32_1 = arith.constant 0 : i32
    return %c0_i32, %c0_i32_0 : i32, i32
  }
  func.func @transform_18(%arg0: i32) -> (i32, i32) {
    %c0_i32 = arith.constant 0 : i32
    %c0_i32_0 = arith.constant 0 : i32
    return %arg0, %c0_i32 : i32, i32
  }
}

</mosaic_0001>

<llo_original>
// kernel: squeeze.1
$region0: #{squeeze.1}
  %s0 = inlined_call_operand.vmem [shape: f32[8], index: 0, kind: input, shape index: {}]
  %s1 = inlined_call_operand.vmem [shape: f32[2,4], index: 1, kind: output, shape index: {}]
  $region1: #{squeeze.1} parent=0
    #allocation0 [shape = 'u8[4096]{0}', space=vmem, size = 0x1000, scoped, tag = 'scoped mem for output reshape']
    #allocation1 [shape = 'u8[4096]{0}', space=vmem, size = 0x1000, scoped, tag = 'scoped mem for input reshape']
    %s3 = sshllo.u32 0, 1
    %v4 = vld [vmem:[%s0] sm:%s3]
    %5 = vst [vmem:[#allocation1] sm:%s3] %v4
    %v6 = vld [vmem:[#allocation1] sm:$0x1]
    %vm7 = vcmask 31744
    %8 = vst.msk [vmem:[#allocation0] sm:$0x1] %vm7, %v6
    %v9 = vld [vmem:[#allocation1] sm:$0x1]
    %10 = vrot.lane.b32.xlu0 %v9, 124
    %v11 = vpop.permute.xlu0 %10
    %vm12 = vcmask 31744
    %s13 = scalar_lea.vmem [#allocation0], 1
    %14 = vst.msk [vmem:[%s13] sm:$0x1] %vm12, %v11
    %s16 = sshllo.u32 0, 2
    %v18 = vld [vmem:[#allocation0] sm:%s16]
    %s19 = sshllo.u32 0, 2
    %20 = vst [vmem:[%s1] sm:%s19] %v18

// kernel: marnd_forward.1
$region0: #{marnd_forward.1}
  #allocation0 [shape = 'u32[]', space=smem, size = 0x4, offset = 0x4, fixed_abs, tag = 'smem constant byte address 0x4 - core index']
  #allocation1 [shape = 'u32[144,128]{1,0:T(1,128)}', space=vmem, size = 0x12000, scoped, tag = 'internal scratch']
  %s0 = inlined_call_operand.vmem [shape: f32[8,32], index: 0, kind: input, shape index: {}]
  %s1 = inlined_call_operand.vmem [shape: f32[8,32], index: 1, kind: input, shape index: {}]
  %s2 = inlined_call_operand.vmem [shape: f32[32,128], index: 2, kind: input, shape index: {}]
  %s3 = inlined_call_operand.vmem [shape: f32[1,128], index: 3, kind: input, shape index: {}]
  %s4 = inlined_call_operand.vmem [shape: f32[32,32], index: 4, kind: input, shape index: {}]
  %s5 = inlined_call_operand.vmem [shape: f32[32,32], index: 5, kind: input, shape index: {}]
  %s6 = inlined_call_operand.vmem [shape: f32[1,32], index: 6, kind: input, shape index: {}]
  %s7 = inlined_call_operand.vmem [shape: f32[32,32], index: 7, kind: input, shape index: {}]
  %s8 = inlined_call_operand.vmem [shape: f32[32,32], index: 8, kind: input, shape index: {}]
  %s9 = inlined_call_operand.vmem [shape: f32[1,32], index: 9, kind: input, shape index: {}]
  %s10 = inlined_call_operand.vmem [shape: f32[32,32], index: 10, kind: input, shape index: {}]
  %s11 = inlined_call_operand.hbm [shape: f32[32,32], index: 11, kind: input, shape index: {}]
  %s12 = inlined_call_operand.hbm [shape: f32[1,32], index: 12, kind: input, shape index: {}]
  %s13 = inlined_call_operand.hbm [shape: f32[1,32], index: 13, kind: input, shape index: {}]
  %s14 = inlined_call_operand.vmem [shape: f32[32,8], index: 14, kind: input, shape index: {}]
  %s15 = inlined_call_operand.vmem [shape: f32[1,8], index: 15, kind: input, shape index: {}]
  %s16 = inlined_call_operand.vmem [shape: f32[64,16], index: 16, kind: input, shape index: {}]
  %s17 = inlined_call_operand.hbm [shape: f32[1,16], index: 17, kind: input, shape index: {}]
  %s18 = inlined_call_operand.vmem [shape: f32[8,128], index: 18, kind: output, shape index: {}]
  %s19 = sld [smem:[#allocation0]]
  $region98: #{marnd_forward.1} parent=0
    _
  %s21 = ssub.s32 1, %s19
  %s22 = scalar_select 0, %s21, %s19
  $region1: #{marnd_forward.1} parent=0
    #allocation2 [shape = 'u8[16384]{0}', space=vmem, size = 0x4000, scoped, tag = 'input window, operand 11, single buffered']
    #allocation3 [shape = 's32[1]{0}', space=sflag, size = 0x4, scoped, tag = 'scoped memory for marnd_forward.1']
    #allocation4 [shape = 'u8[512]{0}', space=vmem, size = 0x400, scoped, tag = 'input window, operand 12, single buffered']
    #allocation5 [shape = 's32[1]{0}', space=sflag, size = 0x4, scoped, tag = 'scoped memory for marnd_forward.1']
    #allocation6 [shape = 'u8[512]{0}', space=vmem, size = 0x400, scoped, tag = 'input window, operand 13, single buffered']
    #allocation7 [shape = 'u8[512]{0}', space=vmem, size = 0x400, scoped, tag = 'input window, operand 17, single buffered']
    #allocation8 [shape = 's32[1]{0}', space=sflag, size = 0x4, scoped, tag = 'scoped memory for marnd_forward.1']
    %23 = vsyncpa [#allocation3], 0
    %24 = vsyncpa [#allocation5], 0
    %25 = vsyncpa [#allocation8], 0
    // Predicated region
    $region2: #{marnd_forward.1} parent=1 // pred_check
      _
    $region3: #{marnd_forward.1} parent=1 // pred_check_branch
      %27 = sbr.rel (0) target = $region5
    $region4: #{marnd_forward.1} parent=1 // pred_region
      _
    $region5: #{marnd_forward.1} parent=1 // pred_fallthru
      _
    // Predicated region
    $region6: #{marnd_forward.1} parent=1 // pred_check
      _
    $region7: #{marnd_forward.1} parent=1 // pred_check_branch
      %29 = sbr.rel (0) target = $region9
    $region8: #{marnd_forward.1} parent=1 // pred_region
      _
    $region9: #{marnd_forward.1} parent=1 // pred_fallthru
      _
    // Predicated region
    $region10: #{marnd_forward.1} parent=1 // pred_check
      _
    $region11: #{marnd_forward.1} parent=1 // pred_check_branch
      %31 = sbr.rel (0) target = $region13
    $region12: #{marnd_forward.1} parent=1 // pred_region
      _
    $region13: #{marnd_forward.1} parent=1 // pred_fallthru
      _
    // Predicated region
    $region14: #{marnd_forward.1} parent=1 // pred_check
      _
    $region15: #{marnd_forward.1} parent=1 // pred_check_branch
      %33 = sbr.rel (0) target = $region17
    $region16: #{marnd_forward.1} parent=1 // pred_region
      _
    $region17: #{marnd_forward.1} parent=1 // pred_fallthru
      _
    // Predicated region
    $region18: #{marnd_forward.1} parent=1 // pred_check
      _
    $region19: #{marnd_forward.1} parent=1 // pred_check_branch
      %35 = sbr.rel (0) target = $region21
    $region20: #{marnd_forward.1} parent=1 // pred_region
      _
    $region21: #{marnd_forward.1} parent=1 // pred_fallthru
      _
    // Predicated region
    $region22: #{marnd_forward.1} parent=1 // pred_check
      _
    $region23: #{marnd_forward.1} parent=1 // pred_check_branch
      %37 = sbr.rel (0) target = $region25
    $region24: #{marnd_forward.1} parent=1 // pred_region
      _
    $region25: #{marnd_forward.1} parent=1 // pred_fallthru
      _
    // Predicated region
    $region26: #{marnd_forward.1} parent=1 // pred_check
      _
    $region27: #{marnd_forward.1} parent=1 // pred_check_branch
      %39 = sbr.rel (0) target = $region29
    $region28: #{marnd_forward.1} parent=1 // pred_region
      _
    $region29: #{marnd_forward.1} parent=1 // pred_fallthru
      _
    // Predicated region
    $region30: #{marnd_forward.1} parent=1 // pred_check
      _
    $region31: #{marnd_forward.1} parent=1 // pred_check_branch
      %41 = sbr.rel (0) target = $region33
    $region32: #{marnd_forward.1} parent=1 // pred_region
      _
    $region33: #{marnd_forward.1} parent=1 // pred_fallthru
      _
    // Predicated region
    $region34: #{marnd_forward.1} parent=1 // pred_check
      _
    $region35: #{marnd_forward.1} parent=1 // pred_check_branch
      %43 = sbr.rel (0) target = $region37
    $region36: #{marnd_forward.1} parent=1 // pred_region
      _
    $region37: #{marnd_forward.1} parent=1 // pred_fallthru
      _
    // Predicated region
    $region38: #{marnd_forward.1} parent=1 // pred_check
      _
    $region39: #{marnd_forward.1} parent=1 // pred_check_branch
      %45 = sbr.rel (0) target = $region41
    $region40: #{marnd_forward.1} parent=1 // pred_region
      _
    $region41: #{marnd_forward.1} parent=1 // pred_fallthru
      _
    // Predicated region
    $region42: #{marnd_forward.1} parent=1 // pred_check
      _
    $region43: #{marnd_forward.1} parent=1 // pred_check_branch
      %47 = sbr.rel (0) target = $region45
    $region44: #{marnd_forward.1} parent=1 // pred_region
      _
    $region45: #{marnd_forward.1} parent=1 // pred_fallthru
      _
    // Predicated region
    $region46: #{marnd_forward.1} parent=1 // pred_check
      _
    $region47: #{marnd_forward.1} parent=1 // pred_check_branch
      %49 = sbr.rel (0) target = $region49
    $region48: #{marnd_forward.1} parent=1 // pred_region
      %s51 = ssub.s32 512, 512
      %52 = vsyncadd [#allocation3], %s51
      %s53 = sshll.u32 [#allocation2], 4
      %s54 = int_to_ptr.vmem [resolvable:$true] %s53
      %59 = dma.hbm_to_vmem [thread:$0]  %s11, 512, %s54, [#allocation3], 128, 128, 8
    $region49: #{marnd_forward.1} parent=1 // pred_fallthru
      _
    // Predicated region
    $region50: #{marnd_forward.1} parent=1 // pred_check
      _
    $region51: #{marnd_forward.1} parent=1 // pred_check_branch
      %61 = sbr.rel (0) target = $region53
    $region52: #{marnd_forward.1} parent=1 // pred_region
      %s63 = ssub.s32 16, 16
      %64 = vsyncadd [#allocation5], %s63
      %s66 = sshll.u32 [#allocation4], 4
      %s67 = int_to_ptr.vmem [resolvable:$true] %s66
      %69 = dma.hbm_to_vmem [thread:$0]  %s12, 16, %s67, [#allocation5]
    $region53: #{marnd_forward.1} parent=1 // pred_fallthru
      _
    // Predicated region
    $region54: #{marnd_forward.1} parent=1 // pred_check
      _
    $region55: #{marnd_forward.1} parent=1 // pred_check_branch
      %71 = sbr.rel (0) target = $region57
    $region56: #{marnd_forward.1} parent=1 // pred_region
      %s73 = ssub.s32 16, 16
      %74 = vsyncadd [#allocation5], %s73
      %s76 = sshll.u32 [#allocation6], 4
      %s77 = int_to_ptr.vmem [resolvable:$true] %s76
      %79 = dma.hbm_to_vmem [thread:$0]  %s13, 16, %s77, [#allocation5]
    $region57: #{marnd_forward.1} parent=1 // pred_fallthru
      _
    // Predicated region
    $region58: #{marnd_forward.1} parent=1 // pred_check
      _
    $region59: #{marnd_forward.1} parent=1 // pred_check_branch
      %81 = sbr.rel (0) target = $region61
    $region60: #{marnd_forward.1} parent=1 // pred_region
      _
    $region61: #{marnd_forward.1} parent=1 // pred_fallthru
      _
    // Predicated region
    $region62: #{marnd_forward.1} parent=1 // pred_check
      _
    $region63: #{marnd_forward.1} parent=1 // pred_check_branch
      %83 = sbr.rel (0) target = $region65
    $region64: #{marnd_forward.1} parent=1 // pred_region
      _
    $region65: #{marnd_forward.1} parent=1 // pred_fallthru
      _
    // Predicated region
    $region66: #{marnd_forward.1} parent=1 // pred_check
      _
    $region67: #{marnd_forward.1} parent=1 // pred_check_branch
      %85 = sbr.rel (0) target = $region69
    $region68: #{marnd_forward.1} parent=1 // pred_region
      _
    $region69: #{marnd_forward.1} parent=1 // pred_fallthru
      _
    // Predicated region
    $region70: #{marnd_forward.1} parent=1 // pred_check
      _
    $region71: #{marnd_forward.1} parent=1 // pred_check_branch
      %87 = sbr.rel (0) target = $region73
    $region72: #{marnd_forward.1} parent=1 // pred_region
      %s89 = ssub.s32 16, 16
      %90 = vsyncadd [#allocation8], %s89
      %s92 = sshll.u32 [#allocation7], 4
      %s93 = int_to_ptr.vmem [resolvable:$true] %s92
      %95 = dma.hbm_to_vmem [thread:$0]  %s17, 16, %s93, [#allocation8]
    $region73: #{marnd_forward.1} parent=1 // pred_fallthru
      _
    // Predicated region
    $region74: #{marnd_forward.1} parent=1 // pred_check
      _
    $region75: #{marnd_forward.1} parent=1 // pred_check_branch
      %97 = sbr.rel (0) target = $region77
    $region76: #{marnd_forward.1} parent=1 // pred_region
      %98 = dma.done [#allocation3], 512
    $region77: #{marnd_forward.1} parent=1 // pred_fallthru
      _
    // Predicated region
    $region78: #{marnd_forward.1} parent=1 // pred_check
      _
    $region79: #{marnd_forward.1} parent=1 // pred_check_branch
      %100 = sbr.rel (0) target = $region81
    $region80: #{marnd_forward.1} parent=1 // pred_region
      %101 = dma.done [#allocation5], 16
    $region81: #{marnd_forward.1} parent=1 // pred_fallthru
      _
    // Predicated region
    $region82: #{marnd_forward.1} parent=1 // pred_check
      _
    $region83: #{marnd_forward.1} parent=1 // pred_check_branch
      %103 = sbr.rel (0) target = $region85
    $region84: #{marnd_forward.1} parent=1 // pred_region
      %104 = dma.done [#allocation5], 16
    $region85: #{marnd_forward.1} parent=1 // pred_fallthru
      _
    // Predicated region
    $region86: #{marnd_forward.1} parent=1 // pred_check
      _
    $region87: #{marnd_forward.1} parent=1 // pred_check_branch
      %106 = sbr.rel (0) target = $region89
    $region88: #{marnd_forward.1} parent=1 // pred_region
      %107 = dma.done [#allocation8], 16
    $region89: #{marnd_forward.1} parent=1 // pred_fallthru
      _
    %v108 = vld [vmem:[%s0] sm:$0xff]
    %v109 = vld [vmem:[%s1] sm:$0xff]
    %v110 = vld [vmem:[%s2] sm:$0xff]
    %v111 = vld [vmem:[%s2 + $0x8] sm:$0xff]
    %v112 = vld [vmem:[%s2 + $0x10] sm:$0xff]
    %v113 = vld [vmem:[%s2 + $0x18] sm:$0xff]
    %v114 = vld [vmem:[%s3] sm:$0x1]
    %v116 = vlaneseq
    %v117 = vshrl.u32 %v116, 7
    %v118 = vsub.s32 0, %v117
    %v119 = vrot.slane %v114, %v118
    %vm121 = vcmask 261120
    %v123 = vsel %vm121, %v108, 0
    %125 = vmatprep.subr.mxu0 0.0
    %126 = vmatpush1.msra.mxu0 %v110
    %127 = vmatprep.subr.mxu0 0.0
    %128 = vmatpush1.msra.mxu0 %v111
    %129 = vmatprep.subr.mxu0 0.0
    %130 = vmatpush1.msra.mxu0 %v112
    %131 = vmatprep.subr.mxu0 0.0
    %132 = vmatpush1.msra.mxu0 %v113
    %133 = vmatprep.subr.mxu0 0.0
    %134 = vmatpush1.msra.mxu0 0.0
    %135 = vmatprep.subr.mxu0 0.0
    %136 = vmatpush1.msra.mxu0 0.0
    %137 = vmatprep.subr.mxu0 0.0
    %138 = vmatpush1.msra.mxu0 0.0
    %139 = vmatprep.subr.mxu0 0.0
    %140 = vmatpush1.msra.mxu0 0.0
    %141 = vmatprep.subr.mxu0 0.0
    %142 = vmatpush1.msra.mxu0 0.0
    %143 = vmatprep.subr.mxu0 0.0
    %144 = vmatpush1.msra.mxu0 0.0
    %145 = vmatprep.subr.mxu0 0.0
    %146 = vmatpush1.msra.mxu0 0.0
    %147 = vmatprep.subr.mxu0 0.0
    %148 = vmatpush1.msra.mxu0 0.0
    %149 = vmatprep.subr.mxu0 0.0
    %150 = vmatpush1.msra.mxu0 0.0
    %151 = vmatprep.subr.mxu0 0.0
    %152 = vmatpush1.msra.mxu0 0.0
    %153 = vmatprep.subr.mxu0 0.0
    %154 = vmatpush1.msra.mxu0 0.0
    %155 = vmatprep.subr.mxu0 0.0
    %156 = vmatpush1.msra.mxu0 0.0
    %157 = vmatprep.subr.mxu0 0.0
    %158 = vmatpush1.msra.mxu0 0.0
    %159 = vmatprep.subr.mxu0 0.0
    %160 = vmatpush1.msra.mxu0 0.0
    %161 = vmatprep.subr.mxu0 0.0
    %162 = vmatpush1.msra.mxu0 0.0
    %163 = vmatprep.subr.mxu0 0.0
    %164 = vmatpush1.msra.mxu0 0.0
    %165 = vmatprep.subr.mxu0 0.0
    %166 = vmatpush1.msra.mxu0 0.0
    %167 = vmatprep.subr.mxu0 0.0
    %168 = vmatpush1.msra.mxu0 0.0
    %169 = vmatprep.subr.mxu0 0.0
    %170 = vmatpush1.msra.mxu0 0.0
    %171 = vmatprep.subr.mxu0 0.0
    %172 = vmatpush1.msra.mxu0 0.0
    %173 = vmatprep.subr.mxu0 0.0
    %174 = vmatpush1.msra.mxu0 0.0
    %175 = vmatprep.subr.mxu0 0.0
    %176 = vmatpush1.msra.mxu0 0.0
    %177 = vmatprep.subr.mxu0 0.0
    %178 = vmatpush1.msra.mxu0 0.0
    %179 = vmatprep.subr.mxu0 0.0
    %180 = vmatpush1.msra.mxu0 0.0
    %181 = vmatprep.subr.mxu0 0.0
    %182 = vmatpush1.msra.mxu0 0.0
    %183 = vmatprep.subr.mxu0 0.0
    %184 = vmatpush1.msra.mxu0 0.0
    %185 = vmatprep.subr.mxu0 0.0
    %186 = vmatpush1.msra.mxu0 0.0
    %187 = vmatprep.subr.mxu0 0.0
    %188 = vmatpush1.msra.mxu0 0.0
    %189 = vmatprep.mubr.f32.mxu0 0.0
    %190 = vmatmul.mubr.f32.gmra.mrb[0].mxu0 %v123
    %v191 = vpop.f32.mrb[0].mxu0
    %v192 = vadd.f32 %v119, %v191
    %v193 = vpop.f32.mrb[0].mxu0
    %194 = vdwg.mxu0
    %v195 = vmax.f32 %v192, 0.0
    %v196 = vld [vmem:[%s4] sm:$0xff]
    %v197 = vld [vmem:[%s4 + $0x8] sm:$0xff]
    %v198 = vld [vmem:[%s4 + $0x10] sm:$0xff]
    %v199 = vld [vmem:[%s4 + $0x18] sm:$0xff]
    %v200 = vld [vmem:[%s5] sm:$0xff]
    %v201 = vld [vmem:[%s5 + $0x8] sm:$0xff]
    %v202 = vld [vmem:[%s5 + $0x10] sm:$0xff]
    %v203 = vld [vmem:[%s5 + $0x18] sm:$0xff]
    %v205 = vsel %vm121, %v109, 0
    %207 = vmatprep.subr.mxu0 0.0
    %208 = vmatpush1.msra.mxu0 %v200
    %209 = vmatprep.subr.mxu0 0.0
    %210 = vmatpush1.msra.mxu0 %v201
    %211 = vmatprep.subr.mxu0 0.0
    %212 = vmatpush1.msra.mxu0 %v202
    %213 = vmatprep.subr.mxu0 0.0
    %214 = vmatpush1.msra.mxu0 %v203
    %215 = vmatprep.subr.mxu0 0.0
    %216 = vmatpush1.msra.mxu0 0.0
    %217 = vmatprep.subr.mxu0 0.0
    %218 = vmatpush1.msra.mxu0 0.0
    %219 = vmatprep.subr.mxu0 0.0
    %220 = vmatpush1.msra.mxu0 0.0
    %221 = vmatprep.subr.mxu0 0.0
    %222 = vmatpush1.msra.mxu0 0.0
    %223 = vmatprep.subr.mxu0 0.0
    %224 = vmatpush1.msra.mxu0 0.0
    %225 = vmatprep.subr.mxu0 0.0
    %226 = vmatpush1.msra.mxu0 0.0
    %227 = vmatprep.subr.mxu0 0.0
    %228 = vmatpush1.msra.mxu0 0.0
    %229 = vmatprep.subr.mxu0 0.0
    %230 = vmatpush1.msra.mxu0 0.0
    %231 = vmatprep.subr.mxu0 0.0
    %232 = vmatpush1.msra.mxu0 0.0
    %233 = vmatprep.subr.mxu0 0.0
    %234 = vmatpush1.msra.mxu0 0.0
    %235 = vmatprep.subr.mxu0 0.0
    %236 = vmatpush1.msra.mxu0 0.0
    %237 = vmatprep.subr.mxu0 0.0
    %238 = vmatpush1.msra.mxu0 0.0
    %239 = vmatprep.subr.mxu0 0.0
    %240 = vmatpush1.msra.mxu0 0.0
    %241 = vmatprep.subr.mxu0 0.0
    %242 = vmatpush1.msra.mxu0 0.0
    %243 = vmatprep.subr.mxu0 0.0
    %244 = vmatpush1.msra.mxu0 0.0
    %245 = vmatprep.subr.mxu0 0.0
    %246 = vmatpush1.msra.mxu0 0.0
    %247 = vmatprep.subr.mxu0 0.0
    %248 = vmatpush1.msra.mxu0 0.0
    %249 = vmatprep.subr.mxu0 0.0
    %250 = vmatpush1.msra.mxu0 0.0
    %251 = vmatprep.subr.mxu0 0.0
    %252 = vmatpush1.msra.mxu0 0.0
    %253 = vmatprep.subr.mxu0 0.0
    %254 = vmatpush1.msra.mxu0 0.0
    %255 = vmatprep.subr.mxu0 0.0
    %256 = vmatpush1.msra.mxu0 0.0
    %257 = vmatprep.subr.mxu0 0.0
    %258 = vmatpush1.msra.mxu0 0.0
    %259 = vmatprep.subr.mxu0 0.0
    %260 = vmatpush1.msra.mxu0 0.0
    %261 = vmatprep.subr.mxu0 0.0
    %262 = vmatpush1.msra.mxu0 0.0
    %263 = vmatprep.subr.mxu0 0.0
    %264 = vmatpush1.msra.mxu0 0.0
    %265 = vmatprep.subr.mxu0 0.0
    %266 = vmatpush1.msra.mxu0 0.0
    %267 = vmatprep.subr.mxu0 0.0
    %268 = vmatpush1.msra.mxu0 0.0
    %269 = vmatprep.subr.mxu0 0.0
    %270 = vmatpush1.msra.mxu0 0.0
    %271 = vmatprep.mubr.f32.mxu0 0.0
    %272 = vmatmul.mubr.f32.gmra.mrb[0].mxu0 %v205
    %v273 = vpop.f32.mrb[0].mxu0
    %v274 = vadd.f32 0.0, %v273
    %v275 = vpop.f32.mrb[0].mxu0
    %276 = vdwg.mxu0
    %v278 = vsel %vm121, %v195, 0
    %280 = vmatprep.subr.mxu0 0.0
    %281 = vmatpush1.msra.mxu0 %v196
    %282 = vmatprep.subr.mxu0 0.0
    %283 = vmatpush1.msra.mxu0 %v197
    %284 = vmatprep.subr.mxu0 0.0
    %285 = vmatpush1.msra.mxu0 %v198
    %286 = vmatprep.subr.mxu0 0.0
    %287 = vmatpush1.msra.mxu0 %v199
    %288 = vmatprep.subr.mxu0 0.0
    %289 = vmatpush1.msra.mxu0 0.0
    %290 = vmatprep.subr.mxu0 0.0
    %291 = vmatpush1.msra.mxu0 0.0
    %292 = vmatprep.subr.mxu0 0.0
    %293 = vmatpush1.msra.mxu0 0.0
    %294 = vmatprep.subr.mxu0 0.0
    %295 = vmatpush1.msra.mxu0 0.0
    %296 = vmatprep.subr.mxu0 0.0
    %297 = vmatpush1.msra.mxu0 0.0
    %298 = vmatprep.subr.mxu0 0.0
    %299 = vmatpush1.msra.mxu0 0.0
    %300 = vmatprep.subr.mxu0 0.0
    %301 = vmatpush1.msra.mxu0 0.0
    %302 = vmatprep.subr.mxu0 0.0
    %303 = vmatpush1.msra.mxu0 0.0
    %304 = vmatprep.subr.mxu0 0.0
    %305 = vmatpush1.msra.mxu0 0.0
    %306 = vmatprep.subr.mxu0 0.0
    %307 = vmatpush1.msra.mxu0 0.0
    %308 = vmatprep.subr.mxu0 0.0
    %309 = vmatpush1.msra.mxu0 0.0
    %310 = vmatprep.subr.mxu0 0.0
    %311 = vmatpush1.msra.mxu0 0.0
    %312 = vmatprep.subr.mxu0 0.0
    %313 = vmatpush1.msra.mxu0 0.0
    %314 = vmatprep.subr.mxu0 0.0
    %315 = vmatpush1.msra.mxu0 0.0
    %316 = vmatprep.subr.mxu0 0.0
    %317 = vmatpush1.msra.mxu0 0.0
    %318 = vmatprep.subr.mxu0 0.0
    %319 = vmatpush1.msra.mxu0 0.0
    %320 = vmatprep.subr.mxu0 0.0
    %321 = vmatpush1.msra.mxu0 0.0
    %322 = vmatprep.subr.mxu0 0.0
    %323 = vmatpush1.msra.mxu0 0.0
    %324 = vmatprep.subr.mxu0 0.0
    %325 = vmatpush1.msra.mxu0 0.0
    %326 = vmatprep.subr.mxu0 0.0
    %327 = vmatpush1.msra.mxu0 0.0
    %328 = vmatprep.subr.mxu0 0.0
    %329 = vmatpush1.msra.mxu0 0.0
    %330 = vmatprep.subr.mxu0 0.0
    %331 = vmatpush1.msra.mxu0 0.0
    %332 = vmatprep.subr.mxu0 0.0
    %333 = vmatpush1.msra.mxu0 0.0
    %334 = vmatprep.subr.mxu0 0.0
    %335 = vmatpush1.msra.mxu0 0.0
    %336 = vmatprep.subr.mxu0 0.0
    %337 = vmatpush1.msra.mxu0 0.0
    %338 = vmatprep.subr.mxu0 0.0
    %339 = vmatpush1.msra.mxu0 0.0
    %340 = vmatprep.subr.mxu0 0.0
    %341 = vmatpush1.msra.mxu0 0.0
    %342 = vmatprep.subr.mxu0 0.0
    %343 = vmatpush1.msra.mxu0 0.0
    %344 = vmatprep.mubr.f32.mxu0 0.0
    %345 = vmatmul.mubr.f32.gmra.mrb[0].mxu0 %v278
    %v346 = vpop.f32.mrb[0].mxu0
    %v347 = vadd.f32 %v274, %v346
    %v348 = vpop.f32.mrb[0].mxu0
    %349 = vdwg.mxu0
    %v350 = vld [vmem:[%s6] sm:$0x1]
    %v352 = vlaneseq
    %v353 = vshrl.u32 %v352, 7
    %v354 = vsub.s32 0, %v353
    %v355 = vrot.slane %v350, %v354
    %v357 = vadd.f32 %v347, %v355
    %v358 = vxor.u32 %v357, 2147483648
    %v359 = vmul.f32 %v358, 1.442695
    %v360 = vpow.pop %v359
    %v361 = vadd.f32 %v360, 1.0
    %v362 = vrcp.pop %v361
    %v363 = vmul.f32 1.0, %v362
    %v364 = vld [vmem:[%s7] sm:$0xff]
    %v365 = vld [vmem:[%s7 + $0x8] sm:$0xff]
    %v366 = vld [vmem:[%s7 + $0x10] sm:$0xff]
    %v367 = vld [vmem:[%s7 + $0x18] sm:$0xff]
    %v368 = vld [vmem:[%s8] sm:$0xff]
    %v369 = vld [vmem:[%s8 + $0x8] sm:$0xff]
    %v370 = vld [vmem:[%s8 + $0x10] sm:$0xff]
    %v371 = vld [vmem:[%s8 + $0x18] sm:$0xff]
    %372 = vmatprep.subr.mxu0 0.0
    %373 = vmatpush1.msra.mxu0 %v368
    %374 = vmatprep.subr.mxu0 0.0
    %375 = vmatpush1.msra.mxu0 %v369
    %376 = vmatprep.subr.mxu0 0.0
    %377 = vmatpush1.msra.mxu0 %v370
    %378 = vmatprep.subr.mxu0 0.0
    %379 = vmatpush1.msra.mxu0 %v371
    %380 = vmatprep.subr.mxu0 0.0
    %381 = vmatpush1.msra.mxu0 0.0
    %382 = vmatprep.subr.mxu0 0.0
    %383 = vmatpush1.msra.mxu0 0.0
    %384 = vmatprep.subr.mxu0 0.0
    %385 = vmatpush1.msra.mxu0 0.0
    %386 = vmatprep.subr.mxu0 0.0
    %387 = vmatpush1.msra.mxu0 0.0
    %388 = vmatprep.subr.mxu0 0.0
    %389 = vmatpush1.msra.mxu0 0.0
    %390 = vmatprep.subr.mxu0 0.0
    %391 = vmatpush1.msra.mxu0 0.0
    %392 = vmatprep.subr.mxu0 0.0
    %393 = vmatpush1.msra.mxu0 0.0
    %394 = vmatprep.subr.mxu0 0.0
    %395 = vmatpush1.msra.mxu0 0.0
    %396 = vmatprep.subr.mxu0 0.0
    %397 = vmatpush1.msra.mxu0 0.0
    %398 = vmatprep.subr.mxu0 0.0
    %399 = vmatpush1.msra.mxu0 0.0
    %400 = vmatprep.subr.mxu0 0.0
    %401 = vmatpush1.msra.mxu0 0.0
    %402 = vmatprep.subr.mxu0 0.0
    %403 = vmatpush1.msra.mxu0 0.0
    %404 = vmatprep.subr.mxu0 0.0
    %405 = vmatpush1.msra.mxu0 0.0
    %406 = vmatprep.subr.mxu0 0.0
    %407 = vmatpush1.msra.mxu0 0.0
    %408 = vmatprep.subr.mxu0 0.0
    %409 = vmatpush1.msra.mxu0 0.0
    %410 = vmatprep.subr.mxu0 0.0
    %411 = vmatpush1.msra.mxu0 0.0
    %412 = vmatprep.subr.mxu0 0.0
    %413 = vmatpush1.msra.mxu0 0.0
    %414 = vmatprep.subr.mxu0 0.0
    %415 = vmatpush1.msra.mxu0 0.0
    %416 = vmatprep.subr.mxu0 0.0
    %417 = vmatpush1.msra.mxu0 0.0
    %418 = vmatprep.subr.mxu0 0.0
    %419 = vmatpush1.msra.mxu0 0.0
    %420 = vmatprep.subr.mxu0 0.0
    %421 = vmatpush1.msra.mxu0 0.0
    %422 = vmatprep.subr.mxu0 0.0
    %423 = vmatpush1.msra.mxu0 0.0
    %424 = vmatprep.subr.mxu0 0.0
    %425 = vmatpush1.msra.mxu0 0.0
    %426 = vmatprep.subr.mxu0 0.0
    %427 = vmatpush1.msra.mxu0 0.0
    %428 = vmatprep.subr.mxu0 0.0
    %429 = vmatpush1.msra.mxu0 0.0
    %430 = vmatprep.subr.mxu0 0.0
    %431 = vmatpush1.msra.mxu0 0.0
    %432 = vmatprep.subr.mxu0 0.0
    %433 = vmatpush1.msra.mxu0 0.0
    %434 = vmatprep.subr.mxu0 0.0
    %435 = vmatpush1.msra.mxu0 0.0
    %436 = vmatprep.mubr.f32.mxu0 0.0
    %437 = vmatmul.mubr.f32.gmra.mrb[0].mxu0 %v205
    %v438 = vpop.f32.mrb[0].mxu0
    %v439 = vadd.f32 0.0, %v438
    %v440 = vpop.f32.mrb[0].mxu0
    %441 = vdwg.mxu0
    %442 = vmatprep.subr.mxu0 0.0
    %443 = vmatpush1.msra.mxu0 %v364
    %444 = vmatprep.subr.mxu0 0.0
    %445 = vmatpush1.msra.mxu0 %v365
    %446 = vmatprep.subr.mxu0 0.0
    %447 = vmatpush1.msra.mxu0 %v366
    %448 = vmatprep.subr.mxu0 0.0
    %449 = vmatpush1.msra.mxu0 %v367
    %450 = vmatprep.subr.mxu0 0.0
    %451 = vmatpush1.msra.mxu0 0.0
    %452 = vmatprep.subr.mxu0 0.0
    %453 = vmatpush1.msra.mxu0 0.0
    %454 = vmatprep.subr.mxu0 0.0
    %455 = vmatpush1.msra.mxu0 0.0
    %456 = vmatprep.subr.mxu0 0.0
    %457 = vmatpush1.msra.mxu0 0.0
    %458 = vmatprep.subr.mxu0 0.0
    %459 = vmatpush1.msra.mxu0 0.0
    %460 = vmatprep.subr.mxu0 0.0
    %461 = vmatpush1.msra.mxu0 0.0
    %462 = vmatprep.subr.mxu0 0.0
    %463 = vmatpush1.msra.mxu0 0.0
    %464 = vmatprep.subr.mxu0 0.0
    %465 = vmatpush1.msra.mxu0 0.0
    %466 = vmatprep.subr.mxu0 0.0
    %467 = vmatpush1.msra.mxu0 0.0
    %468 = vmatprep.subr.mxu0 0.0
    %469 = vmatpush1.msra.mxu0 0.0
    %470 = vmatprep.subr.mxu0 0.0
    %471 = vmatpush1.msra.mxu0 0.0
    %472 = vmatprep.subr.mxu0 0.0
    %473 = vmatpush1.msra.mxu0 0.0
    %474 = vmatprep.subr.mxu0 0.0
    %475 = vmatpush1.msra.mxu0 0.0
    %476 = vmatprep.subr.mxu0 0.0
    %477 = vmatpush1.msra.mxu0 0.0
    %478 = vmatprep.subr.mxu0 0.0
    %479 = vmatpush1.msra.mxu0 0.0
    %480 = vmatprep.subr.mxu0 0.0
    %481 = vmatpush1.msra.mxu0 0.0
    %482 = vmatprep.subr.mxu0 0.0
    %483 = vmatpush1.msra.mxu0 0.0
    %484 = vmatprep.subr.mxu0 0.0
    %485 = vmatpush1.msra.mxu0 0.0
    %486 = vmatprep.subr.mxu0 0.0
    %487 = vmatpush1.msra.mxu0 0.0
    %488 = vmatprep.subr.mxu0 0.0
    %489 = vmatpush1.msra.mxu0 0.0
    %490 = vmatprep.subr.mxu0 0.0
    %491 = vmatpush1.msra.mxu0 0.0
    %492 = vmatprep.subr.mxu0 0.0
    %493 = vmatpush1.msra.mxu0 0.0
    %494 = vmatprep.subr.mxu0 0.0
    %495 = vmatpush1.msra.mxu0 0.0
    %496 = vmatprep.subr.mxu0 0.0
    %497 = vmatpush1.msra.mxu0 0.0
    %498 = vmatprep.subr.mxu0 0.0
    %499 = vmatpush1.msra.mxu0 0.0
    %500 = vmatprep.subr.mxu0 0.0
    %501 = vmatpush1.msra.mxu0 0.0
    %502 = vmatprep.subr.mxu0 0.0
    %503 = vmatpush1.msra.mxu0 0.0
    %504 = vmatprep.subr.mxu0 0.0
    %505 = vmatpush1.msra.mxu0 0.0
    %506 = vmatprep.mubr.f32.mxu0 0.0
    %507 = vmatmul.mubr.f32.gmra.mrb[0].mxu0 %v278
    %v508 = vpop.f32.mrb[0].mxu0
    %v509 = vadd.f32 %v439, %v508
    %v510 = vpop.f32.mrb[0].mxu0
    %511 = vdwg.mxu0
    %v512 = vld [vmem:[%s9] sm:$0x1]
    %v514 = vlaneseq
    %v515 = vshrl.u32 %v514, 7
    %v516 = vsub.s32 0, %v515
    %v517 = vrot.slane %v512, %v516
    %v519 = vadd.f32 %v509, %v517
    %v520 = vxor.u32 %v519, 2147483648
    %v521 = vmul.f32 %v520, 1.442695
    %v522 = vpow.pop %v521
    %v523 = vadd.f32 %v522, 1.0
    %v524 = vrcp.pop %v523
    %v525 = vmul.f32 1.0, %v524
    %v526 = vld [vmem:[%s10] sm:$0xff]
    %v527 = vld [vmem:[%s10 + $0x8] sm:$0xff]
    %v528 = vld [vmem:[%s10 + $0x10] sm:$0xff]
    %v529 = vld [vmem:[%s10 + $0x18] sm:$0xff]
    %v530 = vld [vmem:[#allocation4] sm:$0x1]
    %v532 = vlaneseq
    %v533 = vshrl.u32 %v532, 7
    %v534 = vsub.s32 0, %v533
    %v535 = vrot.slane %v530, %v534
    %537 = vmatprep.subr.mxu0 0.0
    %538 = vmatpush1.msra.mxu0 %v526
    %539 = vmatprep.subr.mxu0 0.0
    %540 = vmatpush1.msra.mxu0 %v527
    %541 = vmatprep.subr.mxu0 0.0
    %542 = vmatpush1.msra.mxu0 %v528
    %543 = vmatprep.subr.mxu0 0.0
    %544 = vmatpush1.msra.mxu0 %v529
    %545 = vmatprep.subr.mxu0 0.0
    %546 = vmatpush1.msra.mxu0 0.0
    %547 = vmatprep.subr.mxu0 0.0
    %548 = vmatpush1.msra.mxu0 0.0
    %549 = vmatprep.subr.mxu0 0.0
    %550 = vmatpush1.msra.mxu0 0.0
    %551 = vmatprep.subr.mxu0 0.0
    %552 = vmatpush1.msra.mxu0 0.0
    %553 = vmatprep.subr.mxu0 0.0
    %554 = vmatpush1.msra.mxu0 0.0
    %555 = vmatprep.subr.mxu0 0.0
    %556 = vmatpush1.msra.mxu0 0.0
    %557 = vmatprep.subr.mxu0 0.0
    %558 = vmatpush1.msra.mxu0 0.0
    %559 = vmatprep.subr.mxu0 0.0
    %560 = vmatpush1.msra.mxu0 0.0
    %561 = vmatprep.subr.mxu0 0.0
    %562 = vmatpush1.msra.mxu0 0.0
    %563 = vmatprep.subr.mxu0 0.0
    %564 = vmatpush1.msra.mxu0 0.0
    %565 = vmatprep.subr.mxu0 0.0
    %566 = vmatpush1.msra.mxu0 0.0
    %567 = vmatprep.subr.mxu0 0.0
    %568 = vmatpush1.msra.mxu0 0.0
    %569 = vmatprep.subr.mxu0 0.0
    %570 = vmatpush1.msra.mxu0 0.0
    %571 = vmatprep.subr.mxu0 0.0
    %572 = vmatpush1.msra.mxu0 0.0
    %573 = vmatprep.subr.mxu0 0.0
    %574 = vmatpush1.msra.mxu0 0.0
    %575 = vmatprep.subr.mxu0 0.0
    %576 = vmatpush1.msra.mxu0 0.0
    %577 = vmatprep.subr.mxu0 0.0
    %578 = vmatpush1.msra.mxu0 0.0
    %579 = vmatprep.subr.mxu0 0.0
    %580 = vmatpush1.msra.mxu0 0.0
    %581 = vmatprep.subr.mxu0 0.0
    %582 = vmatpush1.msra.mxu0 0.0
    %583 = vmatprep.subr.mxu0 0.0
    %584 = vmatpush1.msra.mxu0 0.0
    %585 = vmatprep.subr.mxu0 0.0
    %586 = vmatpush1.msra.mxu0 0.0
    %587 = vmatprep.subr.mxu0 0.0
    %588 = vmatpush1.msra.mxu0 0.0
    %589 = vmatprep.subr.mxu0 0.0
    %590 = vmatpush1.msra.mxu0 0.0
    %591 = vmatprep.subr.mxu0 0.0
    %592 = vmatpush1.msra.mxu0 0.0
    %593 = vmatprep.subr.mxu0 0.0
    %594 = vmatpush1.msra.mxu0 0.0
    %595 = vmatprep.subr.mxu0 0.0
    %596 = vmatpush1.msra.mxu0 0.0
    %597 = vmatprep.subr.mxu0 0.0
    %598 = vmatpush1.msra.mxu0 0.0
    %599 = vmatprep.subr.mxu0 0.0
    %600 = vmatpush1.msra.mxu0 0.0
    %601 = vmatprep.mubr.f32.mxu0 0.0
    %602 = vmatmul.mubr.f32.gmra.mrb[0].mxu0 %v278
    %v603 = vpop.f32.mrb[0].mxu0
    %v604 = vadd.f32 %v535, %v603
    %v605 = vpop.f32.mrb[0].mxu0
    %606 = vdwg.mxu0
    %v607 = vld [vmem:[#allocation2] sm:$0xff]
    %v608 = vld [vmem:[#allocation2 + $0x8] sm:$0xff]
    %v609 = vld [vmem:[#allocation2 + $0x10] sm:$0xff]
    %v610 = vld [vmem:[#allocation2 + $0x18] sm:$0xff]
    %v611 = vld [vmem:[#allocation6] sm:$0x1]
    %v613 = vlaneseq
    %v614 = vshrl.u32 %v613, 7
    %v615 = vsub.s32 0, %v614
    %v616 = vrot.slane %v611, %v615
    %618 = vmatprep.subr.mxu0 0.0
    %619 = vmatpush1.msra.mxu0 %v607
    %620 = vmatprep.subr.mxu0 0.0
    %621 = vmatpush1.msra.mxu0 %v608
    %622 = vmatprep.subr.mxu0 0.0
    %623 = vmatpush1.msra.mxu0 %v609
    %624 = vmatprep.subr.mxu0 0.0
    %625 = vmatpush1.msra.mxu0 %v610
    %626 = vmatprep.subr.mxu0 0.0
    %627 = vmatpush1.msra.mxu0 0.0
    %628 = vmatprep.subr.mxu0 0.0
    %629 = vmatpush1.msra.mxu0 0.0
    %630 = vmatprep.subr.mxu0 0.0
    %631 = vmatpush1.msra.mxu0 0.0
    %632 = vmatprep.subr.mxu0 0.0
    %633 = vmatpush1.msra.mxu0 0.0
    %634 = vmatprep.subr.mxu0 0.0
    %635 = vmatpush1.msra.mxu0 0.0
    %636 = vmatprep.subr.mxu0 0.0
    %637 = vmatpush1.msra.mxu0 0.0
    %638 = vmatprep.subr.mxu0 0.0
    %639 = vmatpush1.msra.mxu0 0.0
    %640 = vmatprep.subr.mxu0 0.0
    %641 = vmatpush1.msra.mxu0 0.0
    %642 = vmatprep.subr.mxu0 0.0
    %643 = vmatpush1.msra.mxu0 0.0
    %644 = vmatprep.subr.mxu0 0.0
    %645 = vmatpush1.msra.mxu0 0.0
    %646 = vmatprep.subr.mxu0 0.0
    %647 = vmatpush1.msra.mxu0 0.0
    %648 = vmatprep.subr.mxu0 0.0
    %649 = vmatpush1.msra.mxu0 0.0
    %650 = vmatprep.subr.mxu0 0.0
    %651 = vmatpush1.msra.mxu0 0.0
    %652 = vmatprep.subr.mxu0 0.0
    %653 = vmatpush1.msra.mxu0 0.0
    %654 = vmatprep.subr.mxu0 0.0
    %655 = vmatpush1.msra.mxu0 0.0
    %656 = vmatprep.subr.mxu0 0.0
    %657 = vmatpush1.msra.mxu0 0.0
    %658 = vmatprep.subr.mxu0 0.0
    %659 = vmatpush1.msra.mxu0 0.0
    %660 = vmatprep.subr.mxu0 0.0
    %661 = vmatpush1.msra.mxu0 0.0
    %662 = vmatprep.subr.mxu0 0.0
    %663 = vmatpush1.msra.mxu0 0.0
    %664 = vmatprep.subr.mxu0 0.0
    %665 = vmatpush1.msra.mxu0 0.0
    %666 = vmatprep.subr.mxu0 0.0
    %667 = vmatpush1.msra.mxu0 0.0
    %668 = vmatprep.subr.mxu0 0.0
    %669 = vmatpush1.msra.mxu0 0.0
    %670 = vmatprep.subr.mxu0 0.0
    %671 = vmatpush1.msra.mxu0 0.0
    %672 = vmatprep.subr.mxu0 0.0
    %673 = vmatpush1.msra.mxu0 0.0
    %674 = vmatprep.subr.mxu0 0.0
    %675 = vmatpush1.msra.mxu0 0.0
    %676 = vmatprep.subr.mxu0 0.0
    %677 = vmatpush1.msra.mxu0 0.0
    %678 = vmatprep.subr.mxu0 0.0
    %679 = vmatpush1.msra.mxu0 0.0
    %680 = vmatprep.subr.mxu0 0.0
    %681 = vmatpush1.msra.mxu0 0.0
    %682 = vmatprep.mubr.f32.mxu0 0.0
    %683 = vmatmul.mubr.f32.gmra.mrb[0].mxu0 %v205
    %v684 = vpop.f32.mrb[0].mxu0
    %v685 = vadd.f32 %v616, %v684
    %v686 = vpop.f32.mrb[0].mxu0
    %687 = vdwg.mxu0
    %v688 = vmul.f32 %v363, %v685
    %v689 = vadd.f32 %v604, %v688
    %v690 = vtanh.pop %v689
    %v691 = vsub.f32 1.0, %v525
    %v692 = vmul.f32 %v691, %v690
    %v693 = vmul.f32 %v525, %v109
    %v694 = vadd.f32 %v692, %v693
    %v695 = vld [vmem:[%s14] sm:$0xff]
    %v696 = vld [vmem:[%s14 + $0x8] sm:$0xff]
    %v697 = vld [vmem:[%s14 + $0x10] sm:$0xff]
    %v698 = vld [vmem:[%s14 + $0x18] sm:$0xff]
    %v699 = vld [vmem:[%s15] sm:$0x1]
    %v701 = vlaneseq
    %v702 = vshrl.u32 %v701, 7
    %v703 = vsub.s32 0, %v702
    %v704 = vrot.slane %v699, %v703
    %v707 = vsel %vm121, %v694, 0
    %709 = vmatprep.subr.mxu0 0.0
    %710 = vmatpush1.msra.mxu0 %v695
    %711 = vmatprep.subr.mxu0 0.0
    %712 = vmatpush1.msra.mxu0 %v696
    %713 = vmatprep.subr.mxu0 0.0
    %714 = vmatpush1.msra.mxu0 %v697
    %715 = vmatprep.subr.mxu0 0.0
    %716 = vmatpush1.msra.mxu0 %v698
    %717 = vmatprep.subr.mxu0 0.0
    %718 = vmatpush1.msra.mxu0 0.0
    %719 = vmatprep.subr.mxu0 0.0
    %720 = vmatpush1.msra.mxu0 0.0
    %721 = vmatprep.subr.mxu0 0.0
    %722 = vmatpush1.msra.mxu0 0.0
    %723 = vmatprep.subr.mxu0 0.0
    %724 = vmatpush1.msra.mxu0 0.0
    %725 = vmatprep.subr.mxu0 0.0
    %726 = vmatpush1.msra.mxu0 0.0
    %727 = vmatprep.subr.mxu0 0.0
    %728 = vmatpush1.msra.mxu0 0.0
    %729 = vmatprep.subr.mxu0 0.0
    %730 = vmatpush1.msra.mxu0 0.0
    %731 = vmatprep.subr.mxu0 0.0
    %732 = vmatpush1.msra.mxu0 0.0
    %733 = vmatprep.subr.mxu0 0.0
    %734 = vmatpush1.msra.mxu0 0.0
    %735 = vmatprep.subr.mxu0 0.0
    %736 = vmatpush1.msra.mxu0 0.0
    %737 = vmatprep.subr.mxu0 0.0
    %738 = vmatpush1.msra.mxu0 0.0
    %739 = vmatprep.subr.mxu0 0.0
    %740 = vmatpush1.msra.mxu0 0.0
    %741 = vmatprep.subr.mxu0 0.0
    %742 = vmatpush1.msra.mxu0 0.0
    %743 = vmatprep.subr.mxu0 0.0
    %744 = vmatpush1.msra.mxu0 0.0
    %745 = vmatprep.subr.mxu0 0.0
    %746 = vmatpush1.msra.mxu0 0.0
    %747 = vmatprep.subr.mxu0 0.0
    %748 = vmatpush1.msra.mxu0 0.0
    %749 = vmatprep.subr.mxu0 0.0
    %750 = vmatpush1.msra.mxu0 0.0
    %751 = vmatprep.subr.mxu0 0.0
    %752 = vmatpush1.msra.mxu0 0.0
    %753 = vmatprep.subr.mxu0 0.0
    %754 = vmatpush1.msra.mxu0 0.0
    %755 = vmatprep.subr.mxu0 0.0
    %756 = vmatpush1.msra.mxu0 0.0
    %757 = vmatprep.subr.mxu0 0.0
    %758 = vmatpush1.msra.mxu0 0.0
    %759 = vmatprep.subr.mxu0 0.0
    %760 = vmatpush1.msra.mxu0 0.0
    %761 = vmatprep.subr.mxu0 0.0
    %762 = vmatpush1.msra.mxu0 0.0
    %763 = vmatprep.subr.mxu0 0.0
    %764 = vmatpush1.msra.mxu0 0.0
    %765 = vmatprep.subr.mxu0 0.0
    %766 = vmatpush1.msra.mxu0 0.0
    %767 = vmatprep.subr.mxu0 0.0
    %768 = vmatpush1.msra.mxu0 0.0
    %769 = vmatprep.subr.mxu0 0.0
    %770 = vmatpush1.msra.mxu0 0.0
    %771 = vmatprep.subr.mxu0 0.0
    %772 = vmatpush1.msra.mxu0 0.0
    %773 = vmatprep.mubr.f32.mxu0 0.0
    %774 = vmatmul.mubr.f32.gmra.mrb[0].mxu0 %v707
    %v775 = vpop.f32.mrb[0].mxu0
    %v776 = vadd.f32 %v704, %v775
    %v777 = vpop.f32.mrb[0].mxu0
    %778 = vdwg.mxu0
    %v779 = vld [vmem:[%s16] sm:$0xff]
    %v780 = vld [vmem:[%s16 + $0x8] sm:$0xff]
    %v781 = vld [vmem:[%s16 + $0x10] sm:$0xff]
    %v782 = vld [vmem:[%s16 + $0x18] sm:$0xff]
    %v783 = vld [vmem:[%s16 + $0x20] sm:$0xff]
    %v784 = vld [vmem:[%s16 + $0x28] sm:$0xff]
    %v785 = vld [vmem:[%s16 + $0x30] sm:$0xff]
    %v786 = vld [vmem:[%s16 + $0x38] sm:$0xff]
    %v787 = vld [vmem:[#allocation7] sm:$0x1]
    %v789 = vlaneseq
    %v790 = vshrl.u32 %v789, 7
    %v791 = vsub.s32 0, %v790
    %v792 = vrot.slane %v787, %v791
    %794 = vrot.lane.b32.xlu0 %v195, 96
    %v795 = vpop.permute.xlu0 %794
    %vm796 = vcmask 523264
    %v797 = vsel %vm796, %v795, 0
    %799 = vmatprep.subr.mxu0 0.0
    %800 = vmatpush1.msra.mxu0 %v779
    %801 = vmatprep.subr.mxu0 0.0
    %802 = vmatpush1.msra.mxu0 %v780
    %803 = vmatprep.subr.mxu0 0.0
    %804 = vmatpush1.msra.mxu0 %v781
    %805 = vmatprep.subr.mxu0 0.0
    %806 = vmatpush1.msra.mxu0 %v782
    %807 = vmatprep.subr.mxu0 0.0
    %808 = vmatpush1.msra.mxu0 %v783
    %809 = vmatprep.subr.mxu0 0.0
    %810 = vmatpush1.msra.mxu0 %v784
    %811 = vmatprep.subr.mxu0 0.0
    %812 = vmatpush1.msra.mxu0 %v785
    %813 = vmatprep.subr.mxu0 0.0
    %814 = vmatpush1.msra.mxu0 %v786
    %815 = vmatprep.subr.mxu0 0.0
    %816 = vmatpush1.msra.mxu0 0.0
    %817 = vmatprep.subr.mxu0 0.0
    %818 = vmatpush1.msra.mxu0 0.0
    %819 = vmatprep.subr.mxu0 0.0
    %820 = vmatpush1.msra.mxu0 0.0
    %821 = vmatprep.subr.mxu0 0.0
    %822 = vmatpush1.msra.mxu0 0.0
    %823 = vmatprep.subr.mxu0 0.0
    %824 = vmatpush1.msra.mxu0 0.0
    %825 = vmatprep.subr.mxu0 0.0
    %826 = vmatpush1.msra.mxu0 0.0
    %827 = vmatprep.subr.mxu0 0.0
    %828 = vmatpush1.msra.mxu0 0.0
    %829 = vmatprep.subr.mxu0 0.0
    %830 = vmatpush1.msra.mxu0 0.0
    %831 = vmatprep.subr.mxu0 0.0
    %832 = vmatpush1.msra.mxu0 0.0
    %833 = vmatprep.subr.mxu0 0.0
    %834 = vmatpush1.msra.mxu0 0.0
    %835 = vmatprep.subr.mxu0 0.0
    %836 = vmatpush1.msra.mxu0 0.0
    %837 = vmatprep.subr.mxu0 0.0
    %838 = vmatpush1.msra.mxu0 0.0
    %839 = vmatprep.subr.mxu0 0.0
    %840 = vmatpush1.msra.mxu0 0.0
    %841 = vmatprep.subr.mxu0 0.0
    %842 = vmatpush1.msra.mxu0 0.0
    %843 = vmatprep.subr.mxu0 0.0
    %844 = vmatpush1.msra.mxu0 0.0
    %845 = vmatprep.subr.mxu0 0.0
    %846 = vmatpush1.msra.mxu0 0.0
    %847 = vmatprep.subr.mxu0 0.0
    %848 = vmatpush1.msra.mxu0 0.0
    %849 = vmatprep.subr.mxu0 0.0
    %850 = vmatpush1.msra.mxu0 0.0
    %851 = vmatprep.subr.mxu0 0.0
    %852 = vmatpush1.msra.mxu0 0.0
    %853 = vmatprep.subr.mxu0 0.0
    %854 = vmatpush1.msra.mxu0 0.0
    %855 = vmatprep.subr.mxu0 0.0
    %856 = vmatpush1.msra.mxu0 0.0
    %857 = vmatprep.subr.mxu0 0.0
    %858 = vmatpush1.msra.mxu0 0.0
    %859 = vmatprep.subr.mxu0 0.0
    %860 = vmatpush1.msra.mxu0 0.0
    %861 = vmatprep.subr.mxu0 0.0
    %862 = vmatpush1.msra.mxu0 0.0
    %863 = vmatprep.mubr.f32.mxu0 0.0
    %864 = vmatmul.mubr.f32.gmra.mrb[0].mxu0 %v797
    %v865 = vpop.f32.mrb[0].mxu0
    %v866 = vadd.f32 %v792, %v865
    %v867 = vpop.f32.mrb[0].mxu0
    %868 = vdwg.mxu0
    %v869 = vmul.f32 %v866, %v866
    %vm870 = vcmask 130048
    %v871 = vsel %vm870, %v869, 0.0
    %872 = vadd.xlane.f32.xlu0 %v871
    %v873 = vpop.xlane.xlu0 %872
    %v874 = vmul.f32 %v873, 0.0625
    %875 = vrot.lane.b32.xlu0 %v195, 64
    %v876 = vpop.permute.xlu0 %875
    %879 = vrot.lane.b32.xlu0 %v776, 48
    %v880 = vpop.permute.xlu0 %879
    %v882 = vsel %vm121, %v694, %v876
    %vm883 = vcmask 392192
    %v884 = vsel %vm883, %v882, %v880
    %vm885 = vcmask 457728
    %v886 = vsel %vm885, %v884, %v874
    %vm887 = vcmask 465920
    %v888 = vsel %vm887, %v886, 0.0
    %889 = vst [vmem:[%s18] sm:$0xff] %v888
    // Predicated region
    $region90: #{marnd_forward.1} parent=1 // pred_check
      _
    $region91: #{marnd_forward.1} parent=1 // pred_check_branch
      %891 = sbr.rel (0) target = $region93
    $region92: #{marnd_forward.1} parent=1 // pred_region
      _
    $region93: #{marnd_forward.1} parent=1 // pred_fallthru
      _
    // Predicated region
    $region94: #{marnd_forward.1} parent=1 // pred_check
      _
    $region95: #{marnd_forward.1} parent=1 // pred_check_branch
      %893 = sbr.rel (0) target = $region97
    $region96: #{marnd_forward.1} parent=1 // pred_region
      _
    $region97: #{marnd_forward.1} parent=1 // pred_fallthru
      _
    %894 = vsyncpa [#allocation3], 1
    %895 = vsyncpa [#allocation5], 1
    %896 = vsyncpa [#allocation8], 1

</llo_original>
